<compile_context>
chip_gen: v7x
topology: tpu7x:2x2x1
jax: 0.10.0
libtpu: 0.0.40
codegen_flags: <defaults>
</compile_context>

<pallas_src>
import jax
import jax.numpy as jnp
from jax.experimental import pallas as pl
from jax.experimental.pallas import tpu as pltpu


def mlp_encoder_kernel(x_ref, w1_ref, b1_ref, w2_ref, b2_ref, w3_ref, b3_ref,
                       std_ref, eps_ref,
                       out_ref, mu_ref):
    x = x_ref[...]
    h = jnp.dot(x, w1_ref[...], preferred_element_type=jnp.float32) + b1_ref[...]
    h = jnp.maximum(h, 0.0)
    h = jnp.dot(h, w2_ref[...], preferred_element_type=jnp.float32) + b2_ref[...]
    h = jnp.maximum(h, 0.0)
    mu = jnp.dot(h, w3_ref[...], preferred_element_type=jnp.float32) + b3_ref[...]
    mu_ref[...] = mu
    out_ref[...] = mu + std_ref[...] * eps_ref[...]   # std is (1, OUT), broadcasts


def mlp_encoder_forward(x, params, eps, *, tile_b=None):
    """x: (B, IN) concatenated context; eps: (B, OUT) unit normal noise.

    Returns (rsample, mu, std) with std broadcast to (B, OUT)."""
    w1, b1, w2, b2, w3, b3, log_var = params
    B, IN = x.shape
    H = w1.shape[1]
    OUT = w3.shape[1]

    # std = sqrt(clamp(exp(log_var), 0.1, 10)) depends only on the parameter:
    # compute once in plain JAX instead of per grid step inside the kernel.
    std = jnp.sqrt(jnp.clip(jnp.exp(log_var), 0.1, 10.0))   # (1, OUT)

    # Tile selection: one big step for small batches (amortize the ~600-cycle
    # per-step overhead); 256 rows per step for large batches (fills the MXU
    # M-dim, keeps VMEM well under the 32 MiB scoped default on every gen,
    # and leaves >=2 parallel steps for v7x megacore sharding).
    if tile_b is None:
        tile_b = B if B <= 256 else 256

    Bp = pl.cdiv(B, tile_b) * tile_b
    if Bp != B:                       # pad batch so the grid divides evenly
        pad = Bp - B
        x = jnp.pad(x, ((0, pad), (0, 0)))
        eps = jnp.pad(eps, ((0, pad), (0, 0)))

    full = lambda i: (0, 0)           # grid-invariant: weights stay VMEM-resident
    row = lambda i: (i, 0)

    out_shapes = (
        jax.ShapeDtypeStruct((Bp, OUT), jnp.float32),  # rsample
        jax.ShapeDtypeStruct((Bp, OUT), jnp.float32),  # mu
    )

    out, mu = pl.pallas_call(
        mlp_encoder_kernel,
        out_shape=out_shapes,
        grid_spec=pltpu.PrefetchScalarGridSpec(
            num_scalar_prefetch=0,
            grid=(Bp // tile_b,),
            in_specs=[
                pl.BlockSpec((tile_b, IN), row),   # x
                pl.BlockSpec((IN, H), full),       # W1
                pl.BlockSpec((1, H), full),        # b1
                pl.BlockSpec((H, H), full),        # W2
                pl.BlockSpec((1, H), full),        # b2
                pl.BlockSpec((H, OUT), full),      # W3
                pl.BlockSpec((1, OUT), full),      # b3
                pl.BlockSpec((1, OUT), full),      # std (precomputed)
                pl.BlockSpec((tile_b, OUT), row),  # eps
            ],
            out_specs=[
                pl.BlockSpec((tile_b, OUT), row),
                pl.BlockSpec((tile_b, OUT), row),
            ],
        ),
        compiler_params=pltpu.CompilerParams(
            dimension_semantics=("parallel",)),
    )(x, w1, b1, w2, b2, w3, b3, std, eps)

    if Bp != B:
        out = out[:B]
        mu = mu[:B]
    std_full = jnp.broadcast_to(std, mu.shape)
    return out, mu, std_full


def init_params(key, in_size, hidden_size, out_size):
    """Deterministic synthetic init (shapes match the PyTorch module)."""
    ks = jax.random.split(key, 6)
    s = 0.1
    w1 = s * jax.random.normal(ks[0], (in_size, hidden_size), jnp.float32)
    b1 = s * jax.random.normal(ks[1], (1, hidden_size), jnp.float32)
    w2 = s * jax.random.normal(ks[2], (hidden_size, hidden_size), jnp.float32)
    b2 = s * jax.random.normal(ks[3], (1, hidden_size), jnp.float32)
    w3 = s * jax.random.normal(ks[4], (hidden_size, out_size), jnp.float32)
    b3 = s * jax.random.normal(ks[5], (1, out_size), jnp.float32)
    log_var = jnp.zeros((1, out_size), jnp.float32)  # nn.Parameter(zeros)
    return (w1, b1, w2, b2, w3, b3, log_var)


def reference_forward(x, params, eps):
    w1, b1, w2, b2, w3, b3, log_var = params
    h = jnp.maximum(x @ w1 + b1, 0.0)
    h = jnp.maximum(h @ w2 + b2, 0.0)
    mu = h @ w3 + b3
    std = jnp.sqrt(jnp.clip(jnp.exp(log_var), 0.1, 10.0))
    return mu + std * eps, mu, jnp.broadcast_to(std, mu.shape)


if __name__ == "__main__":
    # Module hyperparameters (defaults of MLPEncoder)
    hidden_size = 64
    task_embedding_size = 32
    action_size = 2
    state_size = 2
    reward_size = 1
    term_size = 1
    in_size = state_size * 2 + action_size + reward_size + term_size  # 8

    B = 16  # batch of transitions
    key = jax.random.PRNGKey(0)
    k_obs, k_act, k_rew, k_nobs, k_term, k_eps, k_par = jax.random.split(key, 7)

    obs = jax.random.normal(k_obs, (B, state_size), jnp.float32)
    action = jax.random.normal(k_act, (B, action_size), jnp.float32)
    reward = jax.random.normal(k_rew, (B, reward_size), jnp.float32)
    next_obs = jax.random.normal(k_nobs, (B, state_size), jnp.float32)
    term = (jax.random.uniform(k_term, (B, term_size)) > 0.9).astype(jnp.float32)
    eps = jax.random.normal(k_eps, (B, task_embedding_size), jnp.float32)

    params = init_params(k_par, in_size, hidden_size, task_embedding_size)

    # FlattenMlp concat (glue, plain JAX)
    x = jnp.concatenate([obs, action, reward, next_obs, term], axis=1)

    out, mu, std = mlp_encoder_forward(x, params, eps)
    out = jax.block_until_ready(out)
    mu = jax.block_until_ready(mu)
    std = jax.block_until_ready(std)

    ref_out, ref_mu, ref_std = reference_forward(x, params, eps)
    assert jnp.allclose(out, ref_out, atol=1e-5, rtol=1e-5)
    assert jnp.allclose(mu, ref_mu, atol=1e-5, rtol=1e-5)
    assert jnp.allclose(std, ref_std, atol=1e-5, rtol=1e-5)

    # TODO(synk): context_encoding's tanh/mean-over-time and KL(Normal||N(0,1))
    # loss are trivially expressible in plain JAX and left outside the kernel.
    print("KERNEL_OK")
</pallas_src>

<mosaic_0001>
module attributes {stable_mosaic.version = 11 : i64} {
  func.func @mlp_encoder_kernel(%arg0: i32, %arg1: memref<16x8xf32, #tpu.memory_space<vmem>>, %arg2: memref<8x64xf32, #tpu.memory_space<vmem>>, %arg3: memref<1x64xf32, #tpu.memory_space<vmem>>, %arg4: memref<64x64xf32, #tpu.memory_space<vmem>>, %arg5: memref<1x64xf32, #tpu.memory_space<vmem>>, %arg6: memref<64x32xf32, #tpu.memory_space<vmem>>, %arg7: memref<1x32xf32, #tpu.memory_space<vmem>>, %arg8: memref<1x32xf32, #tpu.memory_space<vmem>>, %arg9: memref<16x32xf32, #tpu.memory_space<vmem>>, %arg10: memref<16x32xf32, #tpu.memory_space<vmem>>, %arg11: memref<16x32xf32, #tpu.memory_space<vmem>>) attributes {dimension_semantics = [#tpu.dimension_semantics<parallel>], iteration_bounds = array<i64: 1>, scalar_prefetch = 0 : i64, scratch_operands = 0 : i64, tpu.core_type = #tpu.core_type<tc>, window_params = [{transform_indices = @transform_0, window_bounds = array<i64: 16, 8>}, {pipeline_mode = #tpu.pipeline_mode<synchronous>, transform_indices = @transform_1, window_bounds = array<i64: 8, 64>}, {pipeline_mode = #tpu.pipeline_mode<synchronous>, transform_indices = @transform_2, window_bounds = array<i64: 1, 64>}, {pipeline_mode = #tpu.pipeline_mode<synchronous>, transform_indices = @transform_3, window_bounds = array<i64: 64, 64>}, {pipeline_mode = #tpu.pipeline_mode<synchronous>, transform_indices = @transform_4, window_bounds = array<i64: 1, 64>}, {pipeline_mode = #tpu.pipeline_mode<synchronous>, transform_indices = @transform_5, window_bounds = array<i64: 64, 32>}, {pipeline_mode = #tpu.pipeline_mode<synchronous>, transform_indices = @transform_6, window_bounds = array<i64: 1, 32>}, {pipeline_mode = #tpu.pipeline_mode<synchronous>, transform_indices = @transform_7, window_bounds = array<i64: 1, 32>}, {transform_indices = @transform_8, window_bounds = array<i64: 16, 32>}, {transform_indices = @transform_9, window_bounds = array<i64: 16, 32>}, {transform_indices = @transform_10, window_bounds = array<i64: 16, 32>}]} {
    %c0 = arith.constant 0 : index
    %c0_0 = arith.constant 0 : index
    %0 = vector.load %arg1[%c0, %c0_0] : memref<16x8xf32, #tpu.memory_space<vmem>>, vector<16x8xf32>
    %c0_1 = arith.constant 0 : index
    %c0_2 = arith.constant 0 : index
    %1 = vector.load %arg2[%c0_1, %c0_2] : memref<8x64xf32, #tpu.memory_space<vmem>>, vector<8x64xf32>
    %cst = arith.constant dense<0.000000e+00> : vector<16x64xf32>
    %2 = tpu.matmul %0, %1, %cst {dimension_numbers = #tpu.dot_dimension_numbers<[1], [0], [0], [1], [0, 0, 1, 1], [], []>} : vector<16x8xf32>, vector<8x64xf32>, vector<16x64xf32> -> vector<16x64xf32>
    %c0_3 = arith.constant 0 : index
    %c0_4 = arith.constant 0 : index
    %3 = vector.load %arg3[%c0_3, %c0_4] : memref<1x64xf32, #tpu.memory_space<vmem>>, vector<1x64xf32>
    %4 = vector.broadcast %3 : vector<1x64xf32> to vector<16x64xf32>
    %5 = arith.addf %2, %4 : vector<16x64xf32>
    %cst_5 = arith.constant 0.000000e+00 : f32
    %6 = vector.broadcast %cst_5 : f32 to vector<16x64xf32>
    %7 = arith.maximumf %5, %6 : vector<16x64xf32>
    %c0_6 = arith.constant 0 : index
    %c0_7 = arith.constant 0 : index
    %8 = vector.load %arg4[%c0_6, %c0_7] : memref<64x64xf32, #tpu.memory_space<vmem>>, vector<64x64xf32>
    %cst_8 = arith.constant dense<0.000000e+00> : vector<16x64xf32>
    %9 = tpu.matmul %7, %8, %cst_8 {dimension_numbers = #tpu.dot_dimension_numbers<[1], [0], [0], [1], [0, 0, 1, 1], [], []>} : vector<16x64xf32>, vector<64x64xf32>, vector<16x64xf32> -> vector<16x64xf32>
    %c0_9 = arith.constant 0 : index
    %c0_10 = arith.constant 0 : index
    %10 = vector.load %arg5[%c0_9, %c0_10] : memref<1x64xf32, #tpu.memory_space<vmem>>, vector<1x64xf32>
    %11 = vector.broadcast %10 : vector<1x64xf32> to vector<16x64xf32>
    %12 = arith.addf %9, %11 : vector<16x64xf32>
    %cst_11 = arith.constant 0.000000e+00 : f32
    %13 = vector.broadcast %cst_11 : f32 to vector<16x64xf32>
    %14 = arith.maximumf %12, %13 : vector<16x64xf32>
    %c0_12 = arith.constant 0 : index
    %c0_13 = arith.constant 0 : index
    %15 = vector.load %arg6[%c0_12, %c0_13] : memref<64x32xf32, #tpu.memory_space<vmem>>, vector<64x32xf32>
    %cst_14 = arith.constant dense<0.000000e+00> : vector<16x32xf32>
    %16 = tpu.matmul %14, %15, %cst_14 {dimension_numbers = #tpu.dot_dimension_numbers<[1], [0], [0], [1], [0, 0, 1, 1], [], []>} : vector<16x64xf32>, vector<64x32xf32>, vector<16x32xf32> -> vector<16x32xf32>
    %c0_15 = arith.constant 0 : index
    %c0_16 = arith.constant 0 : index
    %17 = vector.load %arg7[%c0_15, %c0_16] : memref<1x32xf32, #tpu.memory_space<vmem>>, vector<1x32xf32>
    %18 = vector.broadcast %17 : vector<1x32xf32> to vector<16x32xf32>
    %19 = arith.addf %16, %18 : vector<16x32xf32>
    %c0_17 = arith.constant 0 : index
    %c0_18 = arith.constant 0 : index
    %20 = vector.load %arg11[%c0_17, %c0_18] : memref<16x32xf32, #tpu.memory_space<vmem>>, vector<16x32xf32>
    tpu.vector_store %arg11[%c0_17, %c0_18], %19 {strides = array<i32>} : memref<16x32xf32, #tpu.memory_space<vmem>>, vector<16x32xf32>,
    %c0_19 = arith.constant 0 : index
    %c0_20 = arith.constant 0 : index
    %21 = vector.load %arg8[%c0_19, %c0_20] : memref<1x32xf32, #tpu.memory_space<vmem>>, vector<1x32xf32>
    %c0_21 = arith.constant 0 : index
    %c0_22 = arith.constant 0 : index
    %22 = vector.load %arg9[%c0_21, %c0_22] : memref<16x32xf32, #tpu.memory_space<vmem>>, vector<16x32xf32>
    %23 = vector.broadcast %21 : vector<1x32xf32> to vector<16x32xf32>
    %24 = arith.mulf %23, %22 : vector<16x32xf32>
    %25 = arith.addf %19, %24 : vector<16x32xf32>
    %c0_23 = arith.constant 0 : index
    %c0_24 = arith.constant 0 : index
    %26 = vector.load %arg10[%c0_23, %c0_24] : memref<16x32xf32, #tpu.memory_space<vmem>>, vector<16x32xf32>
    tpu.vector_store %arg10[%c0_23, %c0_24], %25 {strides = array<i32>} : memref<16x32xf32, #tpu.memory_space<vmem>>, vector<16x32xf32>,
    return
  }
  func.func @transform_0(%arg0: i32) -> (i32, i32) {
    %c0_i32 = arith.constant 0 : i32
    %c0_i32_0 = arith.constant 0 : i32
    return %arg0, %c0_i32 : i32, i32
  }
  func.func @transform_1(%arg0: i32) -> (i32, i32) {
    %c0_i32 = arith.constant 0 : i32
    %c0_i32_0 = arith.constant 0 : i32
    %c0_i32_1 = arith.constant 0 : i32
    return %c0_i32, %c0_i32_0 : i32, i32
  }
  func.func @transform_2(%arg0: i32) -> (i32, i32) {
    %c0_i32 = arith.constant 0 : i32
    %c0_i32_0 = arith.constant 0 : i32
    %c0_i32_1 = arith.constant 0 : i32
    return %c0_i32, %c0_i32_0 : i32, i32
  }
  func.func @transform_3(%arg0: i32) -> (i32, i32) {
    %c0_i32 = arith.constant 0 : i32
    %c0_i32_0 = arith.constant 0 : i32
    %c0_i32_1 = arith.constant 0 : i32
    return %c0_i32, %c0_i32_0 : i32, i32
  }
  func.func @transform_4(%arg0: i32) -> (i32, i32) {
    %c0_i32 = arith.constant 0 : i32
    %c0_i32_0 = arith.constant 0 : i32
    %c0_i32_1 = arith.constant 0 : i32
    return %c0_i32, %c0_i32_0 : i32, i32
  }
  func.func @transform_5(%arg0: i32) -> (i32, i32) {
    %c0_i32 = arith.constant 0 : i32
    %c0_i32_0 = arith.constant 0 : i32
    %c0_i32_1 = arith.constant 0 : i32
    return %c0_i32, %c0_i32_0 : i32, i32
  }
  func.func @transform_6(%arg0: i32) -> (i32, i32) {
    %c0_i32 = arith.constant 0 : i32
    %c0_i32_0 = arith.constant 0 : i32
    %c0_i32_1 = arith.constant 0 : i32
    return %c0_i32, %c0_i32_0 : i32, i32
  }
  func.func @transform_7(%arg0: i32) -> (i32, i32) {
    %c0_i32 = arith.constant 0 : i32
    %c0_i32_0 = arith.constant 0 : i32
    %c0_i32_1 = arith.constant 0 : i32
    return %c0_i32, %c0_i32_0 : i32, i32
  }
  func.func @transform_8(%arg0: i32) -> (i32, i32) {
    %c0_i32 = arith.constant 0 : i32
    %c0_i32_0 = arith.constant 0 : i32
    return %arg0, %c0_i32 : i32, i32
  }
  func.func @transform_9(%arg0: i32) -> (i32, i32) {
    %c0_i32 = arith.constant 0 : i32
    %c0_i32_0 = arith.constant 0 : i32
    return %arg0, %c0_i32 : i32, i32
  }
  func.func @transform_10(%arg0: i32) -> (i32, i32) {
    %c0_i32 = arith.constant 0 : i32
    %c0_i32_0 = arith.constant 0 : i32
    return %arg0, %c0_i32 : i32, i32
  }
}

</mosaic_0001>

<llo_original>
// kernel: tpu_custom_call.1
$region0: #{tpu_custom_call.1}
  #allocation0 [shape = 'u32[]', space=smem, size = 0x4, offset = 0x4, fixed_abs, tag = 'smem constant byte address 0x4 - core index']
  #allocation1 [shape = 'u32[144,128]{1,0:T(1,128)}', space=vmem, size = 0x12000, scoped, tag = 'internal scratch']
  %s0 = inlined_call_operand.vmem [shape: f32[16,8], index: 0, kind: input, shape index: {}]
  %s1 = inlined_call_operand.vmem [shape: f32[8,64], index: 1, kind: input, shape index: {}]
  %s2 = inlined_call_operand.vmem [shape: f32[1,64], index: 2, kind: input, shape index: {}]
  %s3 = inlined_call_operand.vmem [shape: f32[64,64], index: 3, kind: input, shape index: {}]
  %s4 = inlined_call_operand.vmem [shape: f32[1,64], index: 4, kind: input, shape index: {}]
  %s5 = inlined_call_operand.vmem [shape: f32[64,32], index: 5, kind: input, shape index: {}]
  %s6 = inlined_call_operand.vmem [shape: f32[1,32], index: 6, kind: input, shape index: {}]
  %s7 = inlined_call_operand.vmem [shape: f32[1,32], index: 7, kind: input, shape index: {}]
  %s8 = inlined_call_operand.vmem [shape: f32[16,32], index: 8, kind: input, shape index: {}]
  %s9 = inlined_call_operand.hbm [shape: f32[16,32], index: 9, kind: output, shape index: {0}]
  %s10 = inlined_call_operand.hbm [shape: f32[16,32], index: 10, kind: output, shape index: {1}]
  %11 = xla_tuple %s9, %s10
  %s12 = sld [smem:[#allocation0]]
  $region54: #{tpu_custom_call.1} parent=0
    _
  %s14 = ssub.s32 1, %s12
  %s15 = scalar_select 0, %s14, %s12
  $region1: #{tpu_custom_call.1} parent=0
    #allocation2 [shape = 'u8[8192]{0}', space=vmem, size = 0x2000, scoped, tag = 'output window, operand 0, single buffered']
    #allocation3 [shape = 's32[1]{0}', space=sflag, size = 0x4, scoped, tag = 'scoped memory for tpu_custom_call.1']
    #allocation4 [shape = 'u8[8192]{0}', space=vmem, size = 0x2000, scoped, tag = 'output window, operand 1, single buffered']
    #allocation5 [shape = 's32[1]{0}', space=sflag, size = 0x4, scoped, tag = 'scoped memory for tpu_custom_call.1']
    %16 = vsyncpa [#allocation3], 0
    %17 = vsyncpa [#allocation5], 0
    // Predicated region
    $region2: #{tpu_custom_call.1} parent=1 // pred_check
      _
    $region3: #{tpu_custom_call.1} parent=1 // pred_check_branch
      %19 = sbr.rel (0) target = $region5
    $region4: #{tpu_custom_call.1} parent=1 // pred_region
      _
    $region5: #{tpu_custom_call.1} parent=1 // pred_fallthru
      _
    // Predicated region
    $region6: #{tpu_custom_call.1} parent=1 // pred_check
      _
    $region7: #{tpu_custom_call.1} parent=1 // pred_check_branch
      %21 = sbr.rel (0) target = $region9
    $region8: #{tpu_custom_call.1} parent=1 // pred_region
      _
    $region9: #{tpu_custom_call.1} parent=1 // pred_fallthru
      _
    // Predicated region
    $region10: #{tpu_custom_call.1} parent=1 // pred_check
      _
    $region11: #{tpu_custom_call.1} parent=1 // pred_check_branch
      %23 = sbr.rel (0) target = $region13
    $region12: #{tpu_custom_call.1} parent=1 // pred_region
      _
    $region13: #{tpu_custom_call.1} parent=1 // pred_fallthru
      _
    // Predicated region
    $region14: #{tpu_custom_call.1} parent=1 // pred_check
      _
    $region15: #{tpu_custom_call.1} parent=1 // pred_check_branch
      %25 = sbr.rel (0) target = $region17
    $region16: #{tpu_custom_call.1} parent=1 // pred_region
      _
    $region17: #{tpu_custom_call.1} parent=1 // pred_fallthru
      _
    // Predicated region
    $region18: #{tpu_custom_call.1} parent=1 // pred_check
      _
    $region19: #{tpu_custom_call.1} parent=1 // pred_check_branch
      %27 = sbr.rel (0) target = $region21
    $region20: #{tpu_custom_call.1} parent=1 // pred_region
      _
    $region21: #{tpu_custom_call.1} parent=1 // pred_fallthru
      _
    // Predicated region
    $region22: #{tpu_custom_call.1} parent=1 // pred_check
      _
    $region23: #{tpu_custom_call.1} parent=1 // pred_check_branch
      %29 = sbr.rel (0) target = $region25
    $region24: #{tpu_custom_call.1} parent=1 // pred_region
      _
    $region25: #{tpu_custom_call.1} parent=1 // pred_fallthru
      _
    // Predicated region
    $region26: #{tpu_custom_call.1} parent=1 // pred_check
      _
    $region27: #{tpu_custom_call.1} parent=1 // pred_check_branch
      %31 = sbr.rel (0) target = $region29
    $region28: #{tpu_custom_call.1} parent=1 // pred_region
      _
    $region29: #{tpu_custom_call.1} parent=1 // pred_fallthru
      _
    // Predicated region
    $region30: #{tpu_custom_call.1} parent=1 // pred_check
      _
    $region31: #{tpu_custom_call.1} parent=1 // pred_check_branch
      %33 = sbr.rel (0) target = $region33
    $region32: #{tpu_custom_call.1} parent=1 // pred_region
      _
    $region33: #{tpu_custom_call.1} parent=1 // pred_fallthru
      _
    // Predicated region
    $region34: #{tpu_custom_call.1} parent=1 // pred_check
      _
    $region35: #{tpu_custom_call.1} parent=1 // pred_check_branch
      %35 = sbr.rel (0) target = $region37
    $region36: #{tpu_custom_call.1} parent=1 // pred_region
      _
    $region37: #{tpu_custom_call.1} parent=1 // pred_fallthru
      _
    %v36 = vld [vmem:[%s0] sm:$0xff]
    %v37 = vld [vmem:[%s0 + $0x8] sm:$0xff]
    %v38 = vld [vmem:[%s1] sm:$0xff]
    %v39 = vld [vmem:[%s2] sm:$0x1]
    %v41 = vlaneseq
    %v42 = vshrl.u32 %v41, 7
    %v43 = vsub.s32 0, %v42
    %v44 = vrot.slane %v39, %v43
    %vm46 = vcmask 64512
    %v48 = vsel %vm46, %v36, 0
    %v51 = vsel %vm46, %v37, 0
    %53 = vmatprep.subr.mxu0 0.0
    %54 = vmatpush1.msra.mxu0 %v38
    %55 = vmatprep.subr.mxu0 0.0
    %56 = vmatpush1.msra.mxu0 0.0
    %57 = vmatprep.subr.mxu0 0.0
    %58 = vmatpush1.msra.mxu0 0.0
    %59 = vmatprep.subr.mxu0 0.0
    %60 = vmatpush1.msra.mxu0 0.0
    %61 = vmatprep.subr.mxu0 0.0
    %62 = vmatpush1.msra.mxu0 0.0
    %63 = vmatprep.subr.mxu0 0.0
    %64 = vmatpush1.msra.mxu0 0.0
    %65 = vmatprep.subr.mxu0 0.0
    %66 = vmatpush1.msra.mxu0 0.0
    %67 = vmatprep.subr.mxu0 0.0
    %68 = vmatpush1.msra.mxu0 0.0
    %69 = vmatprep.subr.mxu0 0.0
    %70 = vmatpush1.msra.mxu0 0.0
    %71 = vmatprep.subr.mxu0 0.0
    %72 = vmatpush1.msra.mxu0 0.0
    %73 = vmatprep.subr.mxu0 0.0
    %74 = vmatpush1.msra.mxu0 0.0
    %75 = vmatprep.subr.mxu0 0.0
    %76 = vmatpush1.msra.mxu0 0.0
    %77 = vmatprep.subr.mxu0 0.0
    %78 = vmatpush1.msra.mxu0 0.0
    %79 = vmatprep.subr.mxu0 0.0
    %80 = vmatpush1.msra.mxu0 0.0
    %81 = vmatprep.subr.mxu0 0.0
    %82 = vmatpush1.msra.mxu0 0.0
    %83 = vmatprep.subr.mxu0 0.0
    %84 = vmatpush1.msra.mxu0 0.0
    %85 = vmatprep.subr.mxu0 0.0
    %86 = vmatpush1.msra.mxu0 0.0
    %87 = vmatprep.subr.mxu0 0.0
    %88 = vmatpush1.msra.mxu0 0.0
    %89 = vmatprep.subr.mxu0 0.0
    %90 = vmatpush1.msra.mxu0 0.0
    %91 = vmatprep.subr.mxu0 0.0
    %92 = vmatpush1.msra.mxu0 0.0
    %93 = vmatprep.subr.mxu0 0.0
    %94 = vmatpush1.msra.mxu0 0.0
    %95 = vmatprep.subr.mxu0 0.0
    %96 = vmatpush1.msra.mxu0 0.0
    %97 = vmatprep.subr.mxu0 0.0
    %98 = vmatpush1.msra.mxu0 0.0
    %99 = vmatprep.subr.mxu0 0.0
    %100 = vmatpush1.msra.mxu0 0.0
    %101 = vmatprep.subr.mxu0 0.0
    %102 = vmatpush1.msra.mxu0 0.0
    %103 = vmatprep.subr.mxu0 0.0
    %104 = vmatpush1.msra.mxu0 0.0
    %105 = vmatprep.subr.mxu0 0.0
    %106 = vmatpush1.msra.mxu0 0.0
    %107 = vmatprep.subr.mxu0 0.0
    %108 = vmatpush1.msra.mxu0 0.0
    %109 = vmatprep.subr.mxu0 0.0
    %110 = vmatpush1.msra.mxu0 0.0
    %111 = vmatprep.subr.mxu0 0.0
    %112 = vmatpush1.msra.mxu0 0.0
    %113 = vmatprep.subr.mxu0 0.0
    %114 = vmatpush1.msra.mxu0 0.0
    %115 = vmatprep.subr.mxu0 0.0
    %116 = vmatpush1.msra.mxu0 0.0
    %117 = vmatprep.mubr.f32.mxu0 0.0
    %118 = vmatmul.mubr.f32.gmra.mrb[0].mxu0 %v48
    %v119 = vpop.f32.mrb[0].mxu0
    %v120 = vadd.f32 %v44, %v119
    %v121 = vpop.f32.mrb[0].mxu0
    %122 = vmatprep.mubr.f32.mxu0 0.0
    %123 = vmatmul.mubr.f32.gmra.mrb[0].mxu0 %v51
    %v124 = vpop.f32.mrb[0].mxu0
    %v125 = vadd.f32 %v44, %v124
    %v126 = vpop.f32.mrb[0].mxu0
    %127 = vdwg.mxu0
    %v128 = vmax.f32 %v120, 0.0
    %v129 = vmax.f32 %v125, 0.0
    %v130 = vld [vmem:[%s3] sm:$0xff]
    %v131 = vld [vmem:[%s3 + $0x8] sm:$0xff]
    %v132 = vld [vmem:[%s3 + $0x10] sm:$0xff]
    %v133 = vld [vmem:[%s3 + $0x18] sm:$0xff]
    %v134 = vld [vmem:[%s3 + $0x20] sm:$0xff]
    %v135 = vld [vmem:[%s3 + $0x28] sm:$0xff]
    %v136 = vld [vmem:[%s3 + $0x30] sm:$0xff]
    %v137 = vld [vmem:[%s3 + $0x38] sm:$0xff]
    %v138 = vld [vmem:[%s4] sm:$0x1]
    %v140 = vlaneseq
    %v141 = vshrl.u32 %v140, 7
    %v142 = vsub.s32 0, %v141
    %v143 = vrot.slane %v138, %v142
    %vm145 = vcmask 523264
    %v147 = vsel %vm145, %v128, 0
    %v150 = vsel %vm145, %v129, 0
    %152 = vmatprep.subr.mxu0 0.0
    %153 = vmatpush1.msra.mxu0 %v130
    %154 = vmatprep.subr.mxu0 0.0
    %155 = vmatpush1.msra.mxu0 %v131
    %156 = vmatprep.subr.mxu0 0.0
    %157 = vmatpush1.msra.mxu0 %v132
    %158 = vmatprep.subr.mxu0 0.0
    %159 = vmatpush1.msra.mxu0 %v133
    %160 = vmatprep.subr.mxu0 0.0
    %161 = vmatpush1.msra.mxu0 %v134
    %162 = vmatprep.subr.mxu0 0.0
    %163 = vmatpush1.msra.mxu0 %v135
    %164 = vmatprep.subr.mxu0 0.0
    %165 = vmatpush1.msra.mxu0 %v136
    %166 = vmatprep.subr.mxu0 0.0
    %167 = vmatpush1.msra.mxu0 %v137
    %168 = vmatprep.subr.mxu0 0.0
    %169 = vmatpush1.msra.mxu0 0.0
    %170 = vmatprep.subr.mxu0 0.0
    %171 = vmatpush1.msra.mxu0 0.0
    %172 = vmatprep.subr.mxu0 0.0
    %173 = vmatpush1.msra.mxu0 0.0
    %174 = vmatprep.subr.mxu0 0.0
    %175 = vmatpush1.msra.mxu0 0.0
    %176 = vmatprep.subr.mxu0 0.0
    %177 = vmatpush1.msra.mxu0 0.0
    %178 = vmatprep.subr.mxu0 0.0
    %179 = vmatpush1.msra.mxu0 0.0
    %180 = vmatprep.subr.mxu0 0.0
    %181 = vmatpush1.msra.mxu0 0.0
    %182 = vmatprep.subr.mxu0 0.0
    %183 = vmatpush1.msra.mxu0 0.0
    %184 = vmatprep.subr.mxu0 0.0
    %185 = vmatpush1.msra.mxu0 0.0
    %186 = vmatprep.subr.mxu0 0.0
    %187 = vmatpush1.msra.mxu0 0.0
    %188 = vmatprep.subr.mxu0 0.0
    %189 = vmatpush1.msra.mxu0 0.0
    %190 = vmatprep.subr.mxu0 0.0
    %191 = vmatpush1.msra.mxu0 0.0
    %192 = vmatprep.subr.mxu0 0.0
    %193 = vmatpush1.msra.mxu0 0.0
    %194 = vmatprep.subr.mxu0 0.0
    %195 = vmatpush1.msra.mxu0 0.0
    %196 = vmatprep.subr.mxu0 0.0
    %197 = vmatpush1.msra.mxu0 0.0
    %198 = vmatprep.subr.mxu0 0.0
    %199 = vmatpush1.msra.mxu0 0.0
    %200 = vmatprep.subr.mxu0 0.0
    %201 = vmatpush1.msra.mxu0 0.0
    %202 = vmatprep.subr.mxu0 0.0
    %203 = vmatpush1.msra.mxu0 0.0
    %204 = vmatprep.subr.mxu0 0.0
    %205 = vmatpush1.msra.mxu0 0.0
    %206 = vmatprep.subr.mxu0 0.0
    %207 = vmatpush1.msra.mxu0 0.0
    %208 = vmatprep.subr.mxu0 0.0
    %209 = vmatpush1.msra.mxu0 0.0
    %210 = vmatprep.subr.mxu0 0.0
    %211 = vmatpush1.msra.mxu0 0.0
    %212 = vmatprep.subr.mxu0 0.0
    %213 = vmatpush1.msra.mxu0 0.0
    %214 = vmatprep.subr.mxu0 0.0
    %215 = vmatpush1.msra.mxu0 0.0
    %216 = vmatprep.mubr.f32.mxu0 0.0
    %217 = vmatmul.mubr.f32.gmra.mrb[0].mxu0 %v147
    %v218 = vpop.f32.mrb[0].mxu0
    %v219 = vadd.f32 %v143, %v218
    %v220 = vpop.f32.mrb[0].mxu0
    %221 = vmatprep.mubr.f32.mxu0 0.0
    %222 = vmatmul.mubr.f32.gmra.mrb[0].mxu0 %v150
    %v223 = vpop.f32.mrb[0].mxu0
    %v224 = vadd.f32 %v143, %v223
    %v225 = vpop.f32.mrb[0].mxu0
    %226 = vdwg.mxu0
    %v227 = vmax.f32 %v219, 0.0
    %v228 = vmax.f32 %v224, 0.0
    %v229 = vld [vmem:[%s5] sm:$0xff]
    %v230 = vld [vmem:[%s5 + $0x8] sm:$0xff]
    %v231 = vld [vmem:[%s5 + $0x10] sm:$0xff]
    %v232 = vld [vmem:[%s5 + $0x18] sm:$0xff]
    %v233 = vld [vmem:[%s5 + $0x20] sm:$0xff]
    %v234 = vld [vmem:[%s5 + $0x28] sm:$0xff]
    %v235 = vld [vmem:[%s5 + $0x30] sm:$0xff]
    %v236 = vld [vmem:[%s5 + $0x38] sm:$0xff]
    %v237 = vld [vmem:[%s6] sm:$0x1]
    %v239 = vlaneseq
    %v240 = vshrl.u32 %v239, 7
    %v241 = vsub.s32 0, %v240
    %v242 = vrot.slane %v237, %v241
    %v245 = vsel %vm145, %v227, 0
    %v248 = vsel %vm145, %v228, 0
    %250 = vmatprep.subr.mxu0 0.0
    %251 = vmatpush1.msra.mxu0 %v229
    %252 = vmatprep.subr.mxu0 0.0
    %253 = vmatpush1.msra.mxu0 %v230
    %254 = vmatprep.subr.mxu0 0.0
    %255 = vmatpush1.msra.mxu0 %v231
    %256 = vmatprep.subr.mxu0 0.0
    %257 = vmatpush1.msra.mxu0 %v232
    %258 = vmatprep.subr.mxu0 0.0
    %259 = vmatpush1.msra.mxu0 %v233
    %260 = vmatprep.subr.mxu0 0.0
    %261 = vmatpush1.msra.mxu0 %v234
    %262 = vmatprep.subr.mxu0 0.0
    %263 = vmatpush1.msra.mxu0 %v235
    %264 = vmatprep.subr.mxu0 0.0
    %265 = vmatpush1.msra.mxu0 %v236
    %266 = vmatprep.subr.mxu0 0.0
    %267 = vmatpush1.msra.mxu0 0.0
    %268 = vmatprep.subr.mxu0 0.0
    %269 = vmatpush1.msra.mxu0 0.0
    %270 = vmatprep.subr.mxu0 0.0
    %271 = vmatpush1.msra.mxu0 0.0
    %272 = vmatprep.subr.mxu0 0.0
    %273 = vmatpush1.msra.mxu0 0.0
    %274 = vmatprep.subr.mxu0 0.0
    %275 = vmatpush1.msra.mxu0 0.0
    %276 = vmatprep.subr.mxu0 0.0
    %277 = vmatpush1.msra.mxu0 0.0
    %278 = vmatprep.subr.mxu0 0.0
    %279 = vmatpush1.msra.mxu0 0.0
    %280 = vmatprep.subr.mxu0 0.0
    %281 = vmatpush1.msra.mxu0 0.0
    %282 = vmatprep.subr.mxu0 0.0
    %283 = vmatpush1.msra.mxu0 0.0
    %284 = vmatprep.subr.mxu0 0.0
    %285 = vmatpush1.msra.mxu0 0.0
    %286 = vmatprep.subr.mxu0 0.0
    %287 = vmatpush1.msra.mxu0 0.0
    %288 = vmatprep.subr.mxu0 0.0
    %289 = vmatpush1.msra.mxu0 0.0
    %290 = vmatprep.subr.mxu0 0.0
    %291 = vmatpush1.msra.mxu0 0.0
    %292 = vmatprep.subr.mxu0 0.0
    %293 = vmatpush1.msra.mxu0 0.0
    %294 = vmatprep.subr.mxu0 0.0
    %295 = vmatpush1.msra.mxu0 0.0
    %296 = vmatprep.subr.mxu0 0.0
    %297 = vmatpush1.msra.mxu0 0.0
    %298 = vmatprep.subr.mxu0 0.0
    %299 = vmatpush1.msra.mxu0 0.0
    %300 = vmatprep.subr.mxu0 0.0
    %301 = vmatpush1.msra.mxu0 0.0
    %302 = vmatprep.subr.mxu0 0.0
    %303 = vmatpush1.msra.mxu0 0.0
    %304 = vmatprep.subr.mxu0 0.0
    %305 = vmatpush1.msra.mxu0 0.0
    %306 = vmatprep.subr.mxu0 0.0
    %307 = vmatpush1.msra.mxu0 0.0
    %308 = vmatprep.subr.mxu0 0.0
    %309 = vmatpush1.msra.mxu0 0.0
    %310 = vmatprep.subr.mxu0 0.0
    %311 = vmatpush1.msra.mxu0 0.0
    %312 = vmatprep.subr.mxu0 0.0
    %313 = vmatpush1.msra.mxu0 0.0
    %314 = vmatprep.mubr.f32.mxu0 0.0
    %315 = vmatmul.mubr.f32.gmra.mrb[0].mxu0 %v245
    %v316 = vpop.f32.mrb[0].mxu0
    %v317 = vadd.f32 %v242, %v316
    %v318 = vpop.f32.mrb[0].mxu0
    %319 = vmatprep.mubr.f32.mxu0 0.0
    %320 = vmatmul.mubr.f32.gmra.mrb[0].mxu0 %v248
    %v321 = vpop.f32.mrb[0].mxu0
    %v322 = vadd.f32 %v242, %v321
    %v323 = vpop.f32.mrb[0].mxu0
    %324 = vdwg.mxu0
    %vm325 = vcmask 261120
    %326 = vst.msk [vmem:[#allocation4] sm:$0xff] %vm325, %v317
    %327 = vst.msk [vmem:[#allocation4 + $0x8] sm:$0xff] %vm325, %v322
    %v328 = vld [vmem:[%s7] sm:$0x1]
    %v329 = vld [vmem:[%s8] sm:$0xff]
    %v330 = vld [vmem:[%s8 + $0x8] sm:$0xff]
    %v332 = vlaneseq
    %v333 = vshrl.u32 %v332, 7
    %v334 = vsub.s32 0, %v333
    %v335 = vrot.slane %v328, %v334
    %v337 = vmul.f32 %v335, %v329
    %v338 = vmul.f32 %v335, %v330
    %v339 = vadd.f32 %v317, %v337
    %v340 = vadd.f32 %v322, %v338
    %341 = vst.msk [vmem:[#allocation2] sm:$0xff] %vm325, %v339
    %342 = vst.msk [vmem:[#allocation2 + $0x8] sm:$0xff] %vm325, %v340
    // Predicated region
    $region38: #{tpu_custom_call.1} parent=1 // pred_check
      _
    $region39: #{tpu_custom_call.1} parent=1 // pred_check_branch
      %344 = sbr.rel (0) target = $region41
    $region40: #{tpu_custom_call.1} parent=1 // pred_region
      %s346 = ssub.s32 256, 256
      %347 = vsyncadd [#allocation3], %s346
      %s348 = sshll.u32 [#allocation2], 4
      %s349 = int_to_ptr.vmem [resolvable:$true] %s348
      %354 = dma.vmem_to_hbm [thread:$0]  %s349, 256, %s9, [#allocation3], 128, 128, 8
    $region41: #{tpu_custom_call.1} parent=1 // pred_fallthru
      _
    // Predicated region
    $region42: #{tpu_custom_call.1} parent=1 // pred_check
      _
    $region43: #{tpu_custom_call.1} parent=1 // pred_check_branch
      %356 = sbr.rel (0) target = $region45
    $region44: #{tpu_custom_call.1} parent=1 // pred_region
      %s358 = ssub.s32 256, 256
      %359 = vsyncadd [#allocation5], %s358
      %s360 = sshll.u32 [#allocation4], 4
      %s361 = int_to_ptr.vmem [resolvable:$true] %s360
      %366 = dma.vmem_to_hbm [thread:$0]  %s361, 256, %s10, [#allocation5], 128, 128, 8
    $region45: #{tpu_custom_call.1} parent=1 // pred_fallthru
      _
    // Predicated region
    $region46: #{tpu_custom_call.1} parent=1 // pred_check
      _
    $region47: #{tpu_custom_call.1} parent=1 // pred_check_branch
      %368 = sbr.rel (0) target = $region49
    $region48: #{tpu_custom_call.1} parent=1 // pred_region
      %369 = dma.done [#allocation3], 256
    $region49: #{tpu_custom_call.1} parent=1 // pred_fallthru
      _
    // Predicated region
    $region50: #{tpu_custom_call.1} parent=1 // pred_check
      _
    $region51: #{tpu_custom_call.1} parent=1 // pred_check_branch
      %371 = sbr.rel (0) target = $region53
    $region52: #{tpu_custom_call.1} parent=1 // pred_region
      %372 = dma.done [#allocation5], 256
    $region53: #{tpu_custom_call.1} parent=1 // pred_fallthru
      _
    %373 = vsyncpa [#allocation3], 1
    %374 = vsyncpa [#allocation5], 1

</llo_original>
